<compile_context>
chip_gen: v7x
topology: tpu7x:2x2x1
jax: 0.10.0
libtpu: 0.0.40
codegen_flags: <defaults>
</compile_context>

<pallas_src>
import jax
import jax.numpy as jnp
from jax.experimental import pallas as pl
from jax.experimental.pallas import tpu as pltpu

INPUT_SIZE = 16
HIDDEN_SIZE = 128
NUM_CLASSES = 3

N_PAD = 128   # lane-padded fc2 output width used only inside VMEM / vregs


def _round_up(x, m):
    return ((x + m - 1) // m) * m


def _choose_tb(B):
    """Batch tile: minimal padding for tiny B, large tiles (capped at 2048 so
    double-buffered x/out blocks + the (TB,128) f32 intermediates stay far
    under v5e's 16 MiB default scoped VMEM) for big B, and always >=2 grid
    steps once B is large so both v7x TensorCores get work."""
    if B <= 1024:
        return _round_up(max(B, 1), 8)
    return min(2048, _round_up(pl.cdiv(B, 2), 8))


def mlp_kernel(x_ref, w1_ref, b1_ref, w2_ref, b2_ref, o_ref):
    # fc1: [TB, 16] @ [16, 128] + b1, ReLU  (f32 MXU accumulate, VPU epilogue)
    h = jnp.dot(x_ref[...], w1_ref[...], preferred_element_type=jnp.float32)
    h = jnp.maximum(h + b1_ref[...], 0.0)
    # fc2 against the 128-lane-padded weight: lane-dense MXU dot + bias add.
    out = jnp.dot(h, w2_ref[...], preferred_element_type=jnp.float32)
    out = out + b2_ref[...]
    # Only the first NUM_CLASSES columns are real; HBM-side output block is
    # (TB, NUM_CLASSES) so writeback traffic is minimal (store is masked).
    o_ref[...] = out[:, :NUM_CLASSES].astype(o_ref.dtype)


def pad_params(w1_t, b1, w2_t, b2):
    """One-time padding of the tiny fc2 weight/bias to 128 lanes so the second
    MXU dot and its bias-add are lane-dense.  Call once at init, not per step."""
    w2_p = jnp.zeros((HIDDEN_SIZE, N_PAD), jnp.float32).at[:, :NUM_CLASSES].set(w2_t)
    b2_p = jnp.zeros((1, N_PAD), jnp.float32).at[:, :NUM_CLASSES].set(b2)
    return w1_t, b1, w2_p, b2_p


def mlp_forward(x, w1_t, b1, w2_p, b2_p):
    """x: [B, INPUT_SIZE] f32; w1_t: [INPUT_SIZE, HIDDEN]; b1: [1, HIDDEN];
    w2_p: [HIDDEN, N_PAD] (lane-padded); b2_p: [1, N_PAD] (lane-padded)."""
    B = x.shape[0]
    TB = _choose_tb(B)
    B_pad = _round_up(B, TB)

    # Only the batch dim is padded (rows are independent, so padded rows are
    # simply dropped by the final slice).  No lane padding of x in HBM.
    if B_pad != B:
        x = jnp.pad(x, ((0, B_pad - B), (0, 0)))

    out = pl.pallas_call(
        mlp_kernel,
        out_shape=jax.ShapeDtypeStruct((B_pad, NUM_CLASSES), jnp.float32),
        grid_spec=pltpu.PrefetchScalarGridSpec(
            num_scalar_prefetch=0,
            grid=(B_pad // TB,),
            in_specs=[
                pl.BlockSpec((TB, INPUT_SIZE), lambda i: (i, 0)),         # x tile
                pl.BlockSpec((INPUT_SIZE, HIDDEN_SIZE), lambda i: (0, 0)),  # w1 (resident)
                pl.BlockSpec((1, HIDDEN_SIZE), lambda i: (0, 0)),           # b1 (resident)
                pl.BlockSpec((HIDDEN_SIZE, N_PAD), lambda i: (0, 0)),       # w2 (resident)
                pl.BlockSpec((1, N_PAD), lambda i: (0, 0)),                 # b2 (resident)
            ],
            out_specs=pl.BlockSpec((TB, NUM_CLASSES), lambda i: (i, 0)),
        ),
        compiler_params=pltpu.CompilerParams(
            dimension_semantics=("parallel",)),
    )(x, w1_t, b1, w2_p, b2_p)

    return out[:B]


def init_params(key):
    """Deterministic init mimicking nn.Linear's U(-1/sqrt(fan_in), 1/sqrt(fan_in))."""
    k1, k2, k3, k4 = jax.random.split(key, 4)
    bound1 = 1.0 / jnp.sqrt(INPUT_SIZE)
    bound2 = 1.0 / jnp.sqrt(HIDDEN_SIZE)
    # Stored pre-transposed: [in_features, out_features]
    w1_t = jax.random.uniform(k1, (INPUT_SIZE, HIDDEN_SIZE), jnp.float32,
                              -bound1, bound1)
    b1 = jax.random.uniform(k2, (1, HIDDEN_SIZE), jnp.float32, -bound1, bound1)
    w2_t = jax.random.uniform(k3, (HIDDEN_SIZE, NUM_CLASSES), jnp.float32,
                              -bound2, bound2)
    b2 = jax.random.uniform(k4, (1, NUM_CLASSES), jnp.float32, -bound2, bound2)
    return w1_t, b1, w2_t, b2


def mlp_reference(x, w1_t, b1, w2_t, b2):
    h = jnp.maximum(x @ w1_t + b1, 0.0)
    return h @ w2_t + b2


if __name__ == "__main__":
    key = jax.random.PRNGKey(0)
    kx, kp = jax.random.split(key)

    B = 8  # small batch
    x = jax.random.normal(kx, (B, INPUT_SIZE), dtype=jnp.float32)
    w1_t, b1, w2_t, b2 = init_params(kp)
    params_p = pad_params(w1_t, b1, w2_t, b2)   # one-time fc2 padding

    out = mlp_forward(x, *params_p)
    out = jax.block_until_ready(out)

    ref = mlp_reference(x, w1_t, b1, w2_t, b2)
    assert out.shape == (B, NUM_CLASSES)
    assert jnp.allclose(out, ref, atol=1e-5, rtol=1e-5), "mismatch vs reference"

    print("KERNEL_OK")
</pallas_src>

<mosaic_0001>
module attributes {stable_mosaic.version = 11 : i64} {
  func.func @mlp_kernel(%arg0: i32, %arg1: memref<8x16xf32, #tpu.memory_space<vmem>>, %arg2: memref<16x128xf32, #tpu.memory_space<vmem>>, %arg3: memref<1x128xf32, #tpu.memory_space<vmem>>, %arg4: memref<128x128xf32, #tpu.memory_space<vmem>>, %arg5: memref<1x128xf32, #tpu.memory_space<vmem>>, %arg6: memref<8x3xf32, #tpu.memory_space<vmem>>) attributes {dimension_semantics = [#tpu.dimension_semantics<parallel>], iteration_bounds = array<i64: 1>, scalar_prefetch = 0 : i64, scratch_operands = 0 : i64, tpu.core_type = #tpu.core_type<tc>, window_params = [{transform_indices = @transform_0, window_bounds = array<i64: 8, 16>}, {pipeline_mode = #tpu.pipeline_mode<synchronous>, transform_indices = @transform_1, window_bounds = array<i64: 16, 128>}, {pipeline_mode = #tpu.pipeline_mode<synchronous>, transform_indices = @transform_2, window_bounds = array<i64: 1, 128>}, {pipeline_mode = #tpu.pipeline_mode<synchronous>, transform_indices = @transform_3, window_bounds = array<i64: 128, 128>}, {pipeline_mode = #tpu.pipeline_mode<synchronous>, transform_indices = @transform_4, window_bounds = array<i64: 1, 128>}, {transform_indices = @transform_5, window_bounds = array<i64: 8, 3>}]} {
    %c0 = arith.constant 0 : index
    %c0_0 = arith.constant 0 : index
    %0 = vector.load %arg1[%c0, %c0_0] : memref<8x16xf32, #tpu.memory_space<vmem>>, vector<8x16xf32>
    %c0_1 = arith.constant 0 : index
    %c0_2 = arith.constant 0 : index
    %1 = vector.load %arg2[%c0_1, %c0_2] : memref<16x128xf32, #tpu.memory_space<vmem>>, vector<16x128xf32>
    %cst = arith.constant dense<0.000000e+00> : vector<8x128xf32>
    %2 = tpu.matmul %0, %1, %cst {dimension_numbers = #tpu.dot_dimension_numbers<[1], [0], [0], [1], [0, 0, 1, 1], [], []>} : vector<8x16xf32>, vector<16x128xf32>, vector<8x128xf32> -> vector<8x128xf32>
    %c0_3 = arith.constant 0 : index
    %c0_4 = arith.constant 0 : index
    %3 = vector.load %arg3[%c0_3, %c0_4] : memref<1x128xf32, #tpu.memory_space<vmem>>, vector<1x128xf32>
    %4 = vector.broadcast %3 : vector<1x128xf32> to vector<8x128xf32>
    %5 = arith.addf %2, %4 : vector<8x128xf32>
    %cst_5 = arith.constant 0.000000e+00 : f32
    %6 = vector.broadcast %cst_5 : f32 to vector<8x128xf32>
    %7 = arith.maximumf %5, %6 : vector<8x128xf32>
    %c0_6 = arith.constant 0 : index
    %c0_7 = arith.constant 0 : index
    %8 = vector.load %arg4[%c0_6, %c0_7] : memref<128x128xf32, #tpu.memory_space<vmem>>, vector<128x128xf32>
    %cst_8 = arith.constant dense<0.000000e+00> : vector<8x128xf32>
    %9 = tpu.matmul %7, %8, %cst_8 {dimension_numbers = #tpu.dot_dimension_numbers<[1], [0], [0], [1], [0, 0, 1, 1], [], []>} : vector<8x128xf32>, vector<128x128xf32>, vector<8x128xf32> -> vector<8x128xf32>
    %c0_9 = arith.constant 0 : index
    %c0_10 = arith.constant 0 : index
    %10 = vector.load %arg5[%c0_9, %c0_10] : memref<1x128xf32, #tpu.memory_space<vmem>>, vector<1x128xf32>
    %11 = vector.broadcast %10 : vector<1x128xf32> to vector<8x128xf32>
    %12 = arith.addf %9, %11 : vector<8x128xf32>
    %13 = vector.extract_strided_slice %12 {offsets = [0, 0], sizes = [8, 3], strides = [1, 1]} : vector<8x128xf32> to vector<8x3xf32>
    %c0_11 = arith.constant 0 : index
    %c0_12 = arith.constant 0 : index
    %14 = vector.load %arg6[%c0_11, %c0_12] : memref<8x3xf32, #tpu.memory_space<vmem>>, vector<8x3xf32>
    tpu.vector_store %arg6[%c0_11, %c0_12], %13 {strides = array<i32>} : memref<8x3xf32, #tpu.memory_space<vmem>>, vector<8x3xf32>,
    return
  }
  func.func @transform_0(%arg0: i32) -> (i32, i32) {
    %c0_i32 = arith.constant 0 : i32
    %c0_i32_0 = arith.constant 0 : i32
    return %arg0, %c0_i32 : i32, i32
  }
  func.func @transform_1(%arg0: i32) -> (i32, i32) {
    %c0_i32 = arith.constant 0 : i32
    %c0_i32_0 = arith.constant 0 : i32
    %c0_i32_1 = arith.constant 0 : i32
    return %c0_i32, %c0_i32_0 : i32, i32
  }
  func.func @transform_2(%arg0: i32) -> (i32, i32) {
    %c0_i32 = arith.constant 0 : i32
    %c0_i32_0 = arith.constant 0 : i32
    %c0_i32_1 = arith.constant 0 : i32
    return %c0_i32, %c0_i32_0 : i32, i32
  }
  func.func @transform_3(%arg0: i32) -> (i32, i32) {
    %c0_i32 = arith.constant 0 : i32
    %c0_i32_0 = arith.constant 0 : i32
    %c0_i32_1 = arith.constant 0 : i32
    return %c0_i32, %c0_i32_0 : i32, i32
  }
  func.func @transform_4(%arg0: i32) -> (i32, i32) {
    %c0_i32 = arith.constant 0 : i32
    %c0_i32_0 = arith.constant 0 : i32
    %c0_i32_1 = arith.constant 0 : i32
    return %c0_i32, %c0_i32_0 : i32, i32
  }
  func.func @transform_5(%arg0: i32) -> (i32, i32) {
    %c0_i32 = arith.constant 0 : i32
    %c0_i32_0 = arith.constant 0 : i32
    return %arg0, %c0_i32 : i32, i32
  }
}

</mosaic_0001>

<llo_original>
// kernel: tpu_custom_call.1
$region0: #{tpu_custom_call.1}
  #allocation0 [shape = 'u32[]', space=smem, size = 0x4, offset = 0x4, fixed_abs, tag = 'smem constant byte address 0x4 - core index']
  #allocation1 [shape = 'u32[144,128]{1,0:T(1,128)}', space=vmem, size = 0x12000, scoped, tag = 'internal scratch']
  %s0 = inlined_call_operand.hbm [shape: f32[8,16], index: 0, kind: input, shape index: {}]
  %s1 = inlined_call_operand.hbm [shape: f32[16,128], index: 1, kind: input, shape index: {}]
  %s2 = inlined_call_operand.vmem [shape: f32[1,128], index: 2, kind: input, shape index: {}]
  %s3 = inlined_call_operand.hbm [shape: f32[128,128], index: 3, kind: input, shape index: {}]
  %s4 = inlined_call_operand.vmem [shape: f32[1,128], index: 4, kind: input, shape index: {}]
  %s5 = inlined_call_operand.vmem [shape: f32[8,3], index: 5, kind: output, shape index: {}]
  %s6 = sld [smem:[#allocation0]]
  $region42: #{tpu_custom_call.1} parent=0
    _
  %s8 = ssub.s32 1, %s6
  %s9 = scalar_select 0, %s8, %s6
  $region1: #{tpu_custom_call.1} parent=0
    #allocation2 [shape = 'u8[4096]{0}', space=vmem, size = 0x1000, scoped, tag = 'input window, operand 0, single buffered']
    #allocation3 [shape = 's32[1]{0}', space=sflag, size = 0x4, scoped, tag = 'scoped memory for tpu_custom_call.1']
    #allocation4 [shape = 'u8[8192]{0}', space=vmem, size = 0x2000, scoped, tag = 'input window, operand 1, single buffered']
    #allocation5 [shape = 's32[1]{0}', space=sflag, size = 0x4, scoped, tag = 'scoped memory for tpu_custom_call.1']
    #allocation6 [shape = 'u8[65536]{0}', space=vmem, size = 0x10000, scoped, tag = 'input window, operand 3, single buffered']
    %10 = vsyncpa [#allocation3], 0
    %11 = vsyncpa [#allocation5], 0
    // Predicated region
    $region2: #{tpu_custom_call.1} parent=1 // pred_check
      _
    $region3: #{tpu_custom_call.1} parent=1 // pred_check_branch
      %13 = sbr.rel (0) target = $region5
    $region4: #{tpu_custom_call.1} parent=1 // pred_region
      %s15 = ssub.s32 128, 128
      %16 = vsyncadd [#allocation3], %s15
      %s18 = sshll.u32 [#allocation2], 4
      %s19 = int_to_ptr.vmem [resolvable:$true] %s18
      %21 = dma.hbm_to_vmem [thread:$0]  %s0, 128, %s19, [#allocation3]
    $region5: #{tpu_custom_call.1} parent=1 // pred_fallthru
      _
    // Predicated region
    $region6: #{tpu_custom_call.1} parent=1 // pred_check
      _
    $region7: #{tpu_custom_call.1} parent=1 // pred_check_branch
      %23 = sbr.rel (0) target = $region9
    $region8: #{tpu_custom_call.1} parent=1 // pred_region
      %s25 = ssub.s32 256, 256
      %26 = vsyncadd [#allocation5], %s25
      %s27 = sshll.u32 [#allocation4], 4
      %s28 = int_to_ptr.vmem [resolvable:$true] %s27
      %33 = dma.hbm_to_vmem [thread:$0]  %s1, 256, %s28, [#allocation5], 128, 128, 8
    $region9: #{tpu_custom_call.1} parent=1 // pred_fallthru
      _
    // Predicated region
    $region10: #{tpu_custom_call.1} parent=1 // pred_check
      _
    $region11: #{tpu_custom_call.1} parent=1 // pred_check_branch
      %35 = sbr.rel (0) target = $region13
    $region12: #{tpu_custom_call.1} parent=1 // pred_region
      _
    $region13: #{tpu_custom_call.1} parent=1 // pred_fallthru
      _
    // Predicated region
    $region14: #{tpu_custom_call.1} parent=1 // pred_check
      _
    $region15: #{tpu_custom_call.1} parent=1 // pred_check_branch
      %37 = sbr.rel (0) target = $region17
    $region16: #{tpu_custom_call.1} parent=1 // pred_region
      %s39 = ssub.s32 2048, 2048
      %40 = vsyncadd [#allocation5], %s39
      %s41 = sshll.u32 [#allocation6], 4
      %s42 = int_to_ptr.vmem [resolvable:$true] %s41
      %47 = dma.hbm_to_vmem [thread:$0]  %s3, 2048, %s42, [#allocation5], 128, 128, 8
    $region17: #{tpu_custom_call.1} parent=1 // pred_fallthru
      _
    // Predicated region
    $region18: #{tpu_custom_call.1} parent=1 // pred_check
      _
    $region19: #{tpu_custom_call.1} parent=1 // pred_check_branch
      %49 = sbr.rel (0) target = $region21
    $region20: #{tpu_custom_call.1} parent=1 // pred_region
      _
    $region21: #{tpu_custom_call.1} parent=1 // pred_fallthru
      _
    // Predicated region
    $region22: #{tpu_custom_call.1} parent=1 // pred_check
      _
    $region23: #{tpu_custom_call.1} parent=1 // pred_check_branch
      %51 = sbr.rel (0) target = $region25
    $region24: #{tpu_custom_call.1} parent=1 // pred_region
      %52 = dma.done [#allocation3], 128
    $region25: #{tpu_custom_call.1} parent=1 // pred_fallthru
      _
    // Predicated region
    $region26: #{tpu_custom_call.1} parent=1 // pred_check
      _
    $region27: #{tpu_custom_call.1} parent=1 // pred_check_branch
      %54 = sbr.rel (0) target = $region29
    $region28: #{tpu_custom_call.1} parent=1 // pred_region
      %55 = dma.done [#allocation5], 256
    $region29: #{tpu_custom_call.1} parent=1 // pred_fallthru
      _
    // Predicated region
    $region30: #{tpu_custom_call.1} parent=1 // pred_check
      _
    $region31: #{tpu_custom_call.1} parent=1 // pred_check_branch
      %57 = sbr.rel (0) target = $region33
    $region32: #{tpu_custom_call.1} parent=1 // pred_region
      %58 = dma.done [#allocation5], 2048
    $region33: #{tpu_custom_call.1} parent=1 // pred_fallthru
      _
    %v59 = vld [vmem:[#allocation2] sm:$0xff]
    %v60 = vld [vmem:[#allocation4] sm:$0xff]
    %v61 = vld [vmem:[#allocation4 + $0x8] sm:$0xff]
    %v62 = vld [vmem:[%s2] sm:$0x1]
    %v64 = vlaneseq
    %v65 = vshrl.u32 %v64, 7
    %v66 = vsub.s32 0, %v65
    %v67 = vrot.slane %v62, %v66
    %vm69 = vcmask 130048
    %v71 = vsel %vm69, %v59, 0
    %73 = vmatprep.subr.mxu0 0.0
    %74 = vmatpush1.msra.mxu0 %v60
    %75 = vmatprep.subr.mxu0 0.0
    %76 = vmatpush1.msra.mxu0 %v61
    %77 = vmatprep.subr.mxu0 0.0
    %78 = vmatpush1.msra.mxu0 0.0
    %79 = vmatprep.subr.mxu0 0.0
    %80 = vmatpush1.msra.mxu0 0.0
    %81 = vmatprep.subr.mxu0 0.0
    %82 = vmatpush1.msra.mxu0 0.0
    %83 = vmatprep.subr.mxu0 0.0
    %84 = vmatpush1.msra.mxu0 0.0
    %85 = vmatprep.subr.mxu0 0.0
    %86 = vmatpush1.msra.mxu0 0.0
    %87 = vmatprep.subr.mxu0 0.0
    %88 = vmatpush1.msra.mxu0 0.0
    %89 = vmatprep.subr.mxu0 0.0
    %90 = vmatpush1.msra.mxu0 0.0
    %91 = vmatprep.subr.mxu0 0.0
    %92 = vmatpush1.msra.mxu0 0.0
    %93 = vmatprep.subr.mxu0 0.0
    %94 = vmatpush1.msra.mxu0 0.0
    %95 = vmatprep.subr.mxu0 0.0
    %96 = vmatpush1.msra.mxu0 0.0
    %97 = vmatprep.subr.mxu0 0.0
    %98 = vmatpush1.msra.mxu0 0.0
    %99 = vmatprep.subr.mxu0 0.0
    %100 = vmatpush1.msra.mxu0 0.0
    %101 = vmatprep.subr.mxu0 0.0
    %102 = vmatpush1.msra.mxu0 0.0
    %103 = vmatprep.subr.mxu0 0.0
    %104 = vmatpush1.msra.mxu0 0.0
    %105 = vmatprep.subr.mxu0 0.0
    %106 = vmatpush1.msra.mxu0 0.0
    %107 = vmatprep.subr.mxu0 0.0
    %108 = vmatpush1.msra.mxu0 0.0
    %109 = vmatprep.subr.mxu0 0.0
    %110 = vmatpush1.msra.mxu0 0.0
    %111 = vmatprep.subr.mxu0 0.0
    %112 = vmatpush1.msra.mxu0 0.0
    %113 = vmatprep.subr.mxu0 0.0
    %114 = vmatpush1.msra.mxu0 0.0
    %115 = vmatprep.subr.mxu0 0.0
    %116 = vmatpush1.msra.mxu0 0.0
    %117 = vmatprep.subr.mxu0 0.0
    %118 = vmatpush1.msra.mxu0 0.0
    %119 = vmatprep.subr.mxu0 0.0
    %120 = vmatpush1.msra.mxu0 0.0
    %121 = vmatprep.subr.mxu0 0.0
    %122 = vmatpush1.msra.mxu0 0.0
    %123 = vmatprep.subr.mxu0 0.0
    %124 = vmatpush1.msra.mxu0 0.0
    %125 = vmatprep.subr.mxu0 0.0
    %126 = vmatpush1.msra.mxu0 0.0
    %127 = vmatprep.subr.mxu0 0.0
    %128 = vmatpush1.msra.mxu0 0.0
    %129 = vmatprep.subr.mxu0 0.0
    %130 = vmatpush1.msra.mxu0 0.0
    %131 = vmatprep.subr.mxu0 0.0
    %132 = vmatpush1.msra.mxu0 0.0
    %133 = vmatprep.subr.mxu0 0.0
    %134 = vmatpush1.msra.mxu0 0.0
    %135 = vmatprep.subr.mxu0 0.0
    %136 = vmatpush1.msra.mxu0 0.0
    %137 = vmatprep.mubr.f32.mxu0 0.0
    %138 = vmatmul.mubr.f32.gmra.mrb[0].mxu0 %v71
    %v139 = vpop.f32.mrb[0].mxu0
    %v140 = vadd.f32 %v67, %v139
    %v141 = vpop.f32.mrb[0].mxu0
    %142 = vdwg.mxu0
    %v143 = vmax.f32 %v140, 0.0
    %v144 = vld [vmem:[#allocation6] sm:$0xff]
    %v145 = vld [vmem:[#allocation6 + $0x8] sm:$0xff]
    %v146 = vld [vmem:[#allocation6 + $0x10] sm:$0xff]
    %v147 = vld [vmem:[#allocation6 + $0x18] sm:$0xff]
    %v148 = vld [vmem:[#allocation6 + $0x20] sm:$0xff]
    %v149 = vld [vmem:[#allocation6 + $0x28] sm:$0xff]
    %v150 = vld [vmem:[#allocation6 + $0x30] sm:$0xff]
    %v151 = vld [vmem:[#allocation6 + $0x38] sm:$0xff]
    %v152 = vld [vmem:[#allocation6 + $0x40] sm:$0xff]
    %v153 = vld [vmem:[#allocation6 + $0x48] sm:$0xff]
    %v154 = vld [vmem:[#allocation6 + $0x50] sm:$0xff]
    %v155 = vld [vmem:[#allocation6 + $0x58] sm:$0xff]
    %v156 = vld [vmem:[#allocation6 + $0x60] sm:$0xff]
    %v157 = vld [vmem:[#allocation6 + $0x68] sm:$0xff]
    %v158 = vld [vmem:[#allocation6 + $0x70] sm:$0xff]
    %v159 = vld [vmem:[#allocation6 + $0x78] sm:$0xff]
    %v160 = vld [vmem:[%s4] sm:$0x1]
    %v162 = vlaneseq
    %v163 = vshrl.u32 %v162, 7
    %v164 = vsub.s32 0, %v163
    %v165 = vrot.slane %v160, %v164
    %167 = vmatprep.subr.mxu0 0.0
    %168 = vmatpush1.msra.mxu0 %v144
    %169 = vmatprep.subr.mxu0 0.0
    %170 = vmatpush1.msra.mxu0 %v145
    %171 = vmatprep.subr.mxu0 0.0
    %172 = vmatpush1.msra.mxu0 %v146
    %173 = vmatprep.subr.mxu0 0.0
    %174 = vmatpush1.msra.mxu0 %v147
    %175 = vmatprep.subr.mxu0 0.0
    %176 = vmatpush1.msra.mxu0 %v148
    %177 = vmatprep.subr.mxu0 0.0
    %178 = vmatpush1.msra.mxu0 %v149
    %179 = vmatprep.subr.mxu0 0.0
    %180 = vmatpush1.msra.mxu0 %v150
    %181 = vmatprep.subr.mxu0 0.0
    %182 = vmatpush1.msra.mxu0 %v151
    %183 = vmatprep.subr.mxu0 0.0
    %184 = vmatpush1.msra.mxu0 %v152
    %185 = vmatprep.subr.mxu0 0.0
    %186 = vmatpush1.msra.mxu0 %v153
    %187 = vmatprep.subr.mxu0 0.0
    %188 = vmatpush1.msra.mxu0 %v154
    %189 = vmatprep.subr.mxu0 0.0
    %190 = vmatpush1.msra.mxu0 %v155
    %191 = vmatprep.subr.mxu0 0.0
    %192 = vmatpush1.msra.mxu0 %v156
    %193 = vmatprep.subr.mxu0 0.0
    %194 = vmatpush1.msra.mxu0 %v157
    %195 = vmatprep.subr.mxu0 0.0
    %196 = vmatpush1.msra.mxu0 %v158
    %197 = vmatprep.subr.mxu0 0.0
    %198 = vmatpush1.msra.mxu0 %v159
    %199 = vmatprep.subr.mxu0 0.0
    %200 = vmatpush1.msra.mxu0 0.0
    %201 = vmatprep.subr.mxu0 0.0
    %202 = vmatpush1.msra.mxu0 0.0
    %203 = vmatprep.subr.mxu0 0.0
    %204 = vmatpush1.msra.mxu0 0.0
    %205 = vmatprep.subr.mxu0 0.0
    %206 = vmatpush1.msra.mxu0 0.0
    %207 = vmatprep.subr.mxu0 0.0
    %208 = vmatpush1.msra.mxu0 0.0
    %209 = vmatprep.subr.mxu0 0.0
    %210 = vmatpush1.msra.mxu0 0.0
    %211 = vmatprep.subr.mxu0 0.0
    %212 = vmatpush1.msra.mxu0 0.0
    %213 = vmatprep.subr.mxu0 0.0
    %214 = vmatpush1.msra.mxu0 0.0
    %215 = vmatprep.subr.mxu0 0.0
    %216 = vmatpush1.msra.mxu0 0.0
    %217 = vmatprep.subr.mxu0 0.0
    %218 = vmatpush1.msra.mxu0 0.0
    %219 = vmatprep.subr.mxu0 0.0
    %220 = vmatpush1.msra.mxu0 0.0
    %221 = vmatprep.subr.mxu0 0.0
    %222 = vmatpush1.msra.mxu0 0.0
    %223 = vmatprep.subr.mxu0 0.0
    %224 = vmatpush1.msra.mxu0 0.0
    %225 = vmatprep.subr.mxu0 0.0
    %226 = vmatpush1.msra.mxu0 0.0
    %227 = vmatprep.subr.mxu0 0.0
    %228 = vmatpush1.msra.mxu0 0.0
    %229 = vmatprep.subr.mxu0 0.0
    %230 = vmatpush1.msra.mxu0 0.0
    %231 = vmatprep.mubr.f32.mxu0 0.0
    %232 = vmatmul.mubr.f32.gmra.mrb[0].mxu0 %v143
    %v233 = vpop.f32.mrb[0].mxu0
    %v234 = vadd.f32 %v165, %v233
    %v235 = vpop.f32.mrb[0].mxu0
    %236 = vdwg.mxu0
    %vm237 = vcmask 23552
    %238 = vst.msk [vmem:[%s5] sm:$0xff] %vm237, %v234
    // Predicated region
    $region34: #{tpu_custom_call.1} parent=1 // pred_check
      _
    $region35: #{tpu_custom_call.1} parent=1 // pred_check_branch
      %240 = sbr.rel (0) target = $region37
    $region36: #{tpu_custom_call.1} parent=1 // pred_region
      _
    $region37: #{tpu_custom_call.1} parent=1 // pred_fallthru
      _
    // Predicated region
    $region38: #{tpu_custom_call.1} parent=1 // pred_check
      _
    $region39: #{tpu_custom_call.1} parent=1 // pred_check_branch
      %242 = sbr.rel (0) target = $region41
    $region40: #{tpu_custom_call.1} parent=1 // pred_region
      _
    $region41: #{tpu_custom_call.1} parent=1 // pred_fallthru
      _
    %243 = vsyncpa [#allocation3], 1
    %244 = vsyncpa [#allocation5], 1

</llo_original>
